<compile_context>
chip_gen: v7x
topology: tpu7x:2x2x1
jax: 0.10.0
libtpu: 0.0.40
codegen_flags: <defaults>
</compile_context>

<pallas_src>
import math
from functools import partial

import numpy as np
import jax
import jax.numpy as jnp
from jax import lax
from jax.experimental import pallas as pl
from jax.experimental.pallas import tpu as pltpu

LANES = 128
SUBLANES = 8


# ----------------------------------------------------------------------------
# Anchor generation (deterministic, ZSGNet-style, flatten=True -> tlbr)
# ----------------------------------------------------------------------------
def create_anchors(feat_sizes, ratios, scales):
    """Returns (A, 4) float32 anchors in tlbr (y1, x1, y2, x2), coords in [-1, 1]."""
    aspects = np.array(
        [[s * math.sqrt(r), s * math.sqrt(1.0 / r)] for r in ratios for s in scales],
        dtype=np.float64,
    )
    anchors = []
    for (h, w) in feat_sizes:
        h, w = int(h), int(w)
        sized = aspects * np.array([2.0 / h, 2.0 / w])
        ys = np.linspace(-1 + 1.0 / h, 1 - 1.0 / h, h) if h > 1 else np.array([0.0])
        xs = np.linspace(-1 + 1.0 / w, 1 - 1.0 / w, w) if w > 1 else np.array([0.0])
        gy, gx = np.meshgrid(ys, xs, indexing="ij")
        grid = np.stack([gy, gx], axis=-1).reshape(-1, 2)  # (h*w, 2) = (cy, cx)
        n, k = grid.shape[0], sized.shape[0]
        anc = np.concatenate(
            [np.broadcast_to(grid[:, None, :], (n, k, 2)),
             np.broadcast_to(sized[None, :, :], (n, k, 2))],
            axis=2,
        ).reshape(n * k, 4)  # cthw
        anchors.append(anc)
    cthw = np.concatenate(anchors, axis=0)
    tl = cthw[:, :2] - cthw[:, 2:] / 2.0
    br = cthw[:, :2] + cthw[:, 2:] / 2.0
    return np.concatenate([tl, br], axis=1).astype(np.float32)


# ----------------------------------------------------------------------------
# Pallas kernel: one grid step per image.  Emits, per image:
#   float out row:  max attention logit
#   int   out rows: [attention argmax index, anchor-IoU argmax index]
# ----------------------------------------------------------------------------
def _evaluator_kernel(att_ref, anc_ref, annot_ref, outf_ref, outi_ref):
    b = pl.program_id(0)

    # ---- attention arg-max over raw logits (sigmoid is monotone, skip it) ----
    logits = att_ref[...]                                     # (1, A)
    n_anch = logits.shape[-1]
    lane = lax.broadcasted_iota(jnp.int32, logits.shape, 1)   # 0..A-1 == anchor index
    att_max = jnp.max(logits)
    att_idx = jnp.min(jnp.where(logits == att_max, lane, jnp.int32(n_anch)))

    # ---- IoU(annot[b], anchors) arg-max;  anchors tlbr, sublane-dense (S,128) ----
    ay1 = anc_ref[0]
    ax1 = anc_ref[1]
    ay2 = anc_ref[2]
    ax2 = anc_ref[3]

    gy1 = annot_ref[4 * b + 0]
    gx1 = annot_ref[4 * b + 1]
    gy2 = annot_ref[4 * b + 2]
    gx2 = annot_ref[4 * b + 3]
    g_area = (gy2 - gy1) * (gx2 - gx1)

    iy = jnp.maximum(jnp.minimum(gy2, ay2) - jnp.maximum(gy1, ay1), 0.0)
    ix = jnp.maximum(jnp.minimum(gx2, ax2) - jnp.maximum(gx1, ax1), 0.0)
    inter = iy * ix
    a_area = (ay2 - ay1) * (ax2 - ax1)
    # Exact divide so the arg-max tie-break matches the reference bit-for-bit.
    iou = inter / (g_area + a_area - inter + 1e-8)            # (S, 128)

    row = lax.broadcasted_iota(jnp.int32, iou.shape, 0)
    col = lax.broadcasted_iota(jnp.int32, iou.shape, 1)
    flat = row * iou.shape[-1] + col                          # row-major == anchor index
    big = jnp.int32(iou.shape[0] * iou.shape[1])
    iou_max = jnp.max(iou)
    iou_idx = jnp.min(jnp.where(iou == iou_max, flat, big))   # first occurrence

    # ---- pack the 3 per-image scalars into tiny lane-dense output blocks ----
    outf_ref[...] = jnp.zeros(outf_ref.shape, jnp.float32) + att_max
    ridx = lax.broadcasted_iota(jnp.int32, outi_ref.shape, 0)
    outi_ref[...] = jnp.where(ridx == 0, att_idx, iou_idx)


# ----------------------------------------------------------------------------
# Jitted device function: pallas_call + O(B) tail (gather 2 reg rows / image,
# decode the 2 boxes, IoU vs annot, thresholds, rescale).
# ----------------------------------------------------------------------------
@partial(jax.jit, static_argnames=("acc_thr",))
def _device_eval(att_box, reg_box, annot, img_size, anc_tile, anc_cthw, *, acc_thr):
    B, A = att_box.shape[0], att_box.shape[1]
    S = anc_tile.shape[1]

    # (B, A, 1) -> (B, 1, A): contiguous metadata reshape, no HBM copy/pad.
    att = att_box.reshape(B, 1, A)
    annot_flat = annot.reshape(-1)                            # 1-D SMEM, avoids 2-D padding

    outf, outi = pl.pallas_call(
        _evaluator_kernel,
        out_shape=(jax.ShapeDtypeStruct((B, 1, LANES), jnp.float32),
                   jax.ShapeDtypeStruct((B, 2, LANES), jnp.int32)),
        grid=(B,),
        in_specs=[
            pl.BlockSpec((pl.Squeezed(), 1, A), lambda b: (b, 0, 0)),       # att logits
            pl.BlockSpec((4, S, LANES), lambda b: (0, 0, 0)),               # anchors (resident)
            pl.BlockSpec(memory_space=pltpu.MemorySpace.SMEM),              # annot (1-D)
        ],
        out_specs=(pl.BlockSpec((pl.Squeezed(), 1, LANES), lambda b: (b, 0, 0)),
                   pl.BlockSpec((pl.Squeezed(), 2, LANES), lambda b: (b, 0, 0))),
        compiler_params=pltpu.CompilerParams(
            dimension_semantics=("parallel",),                # v7x: 2 TCs split the batch
            vmem_limit_bytes=32 * 1024 * 1024,                # v5e default is ~16 MiB
        ),
    )(att, anc_tile, annot_flat)

    att_max_logit = outf[:, 0, 0]                             # (B,)
    att_idx = jnp.clip(outi[:, 0, 0], 0, A - 1)               # (B,) int32
    iou_idx = jnp.clip(outi[:, 1, 0], 0, A - 1)               # (B,) int32

    pred_scores = jax.nn.sigmoid(att_max_logit)               # sigmoid of the max logit

    def decode_selected(idx):
        # gather the single selected reg row / anchor per image and decode it
        r = jnp.take_along_axis(reg_box, idx[:, None, None], axis=1)[:, 0, :]  # (B,4)
        a = jnp.take(anc_cthw, idx, axis=0)                                    # (B,4) cy,cx,h,w
        cy = r[:, 0] * a[:, 2] + a[:, 0]
        cx = r[:, 1] * a[:, 3] + a[:, 1]
        h = jnp.exp(r[:, 2]) * a[:, 2]
        w = jnp.exp(r[:, 3]) * a[:, 3]
        return jnp.stack([cy - 0.5 * h, cx - 0.5 * w, cy + 0.5 * h, cx + 0.5 * w], axis=1)

    def diag_iou(b1, b2):
        tl = jnp.maximum(b1[:, :2], b2[:, :2])
        br = jnp.minimum(b1[:, 2:], b2[:, 2:])
        sz = jnp.maximum(br - tl, 0.0)
        inter = sz[:, 0] * sz[:, 1]
        a1 = (b1[:, 2] - b1[:, 0]) * (b1[:, 3] - b1[:, 1])
        a2 = (b2[:, 2] - b2[:, 0]) * (b2[:, 3] - b2[:, 1])
        return inter / (a1 + a2 - inter + 1e-8)

    pred_boxes = decode_selected(att_idx)                     # attention-selected boxes
    oracle_boxes = decode_selected(iou_idx)                   # best-possible (oracle) boxes
    acc = jnp.mean((diag_iou(pred_boxes, annot) >= acc_thr).astype(jnp.float32))
    maxpos = jnp.mean((diag_iou(oracle_boxes, annot) >= acc_thr).astype(jnp.float32))

    # Tail of the PyTorch forward (pure glue on (B, 4) / scalars).
    scaled = (pred_boxes + 1.0) / 2.0 * jnp.concatenate([img_size, img_size], axis=1)
    reshaped_boxes = scaled[:, jnp.array([1, 0, 3, 2])]       # x1y1x2y2 -> y1x1y2x2

    return acc, maxpos, reshaped_boxes, pred_scores


# ----------------------------------------------------------------------------
# Wrapper (anchor creation + one-time host-side layout, then device call)
# ----------------------------------------------------------------------------
def evaluator_forward(out, inp, *, ratios, scales, cfg):
    att_box = jnp.asarray(out['att_out'], jnp.float32)        # (B, A, 1)
    reg_box = jnp.asarray(out['bbx_out'], jnp.float32)        # (B, A, 4)
    feat_sizes = np.asarray(out['feat_sizes'])
    num_f_out = np.asarray(out['num_f_out']).reshape(-1)
    annot = jnp.asarray(inp['annot'], jnp.float32)            # (B, 4) tlbr in [-1, 1]
    img_size = jnp.asarray(inp['img_size'], jnp.float32)      # (B, 2) = (h, w)

    nf = int(num_f_out[0])
    anchs = create_anchors(feat_sizes[:nf], ratios, scales)   # (A, 4) tlbr, numpy
    B, A = int(att_box.shape[0]), int(att_box.shape[1])
    assert anchs.shape[0] == A, f"anchor count mismatch: {anchs.shape[0]} vs {A}"

    # Anchors (tlbr only), sublane-dense (4, S, 128); one-time host-side prep.
    # Padded anchors are degenerate far-away boxes (IoU == 0) at the largest
    # flat indices, so they always lose ties against real anchors.
    tile = SUBLANES * LANES
    A_pad = ((A + tile - 1) // tile) * tile
    S = A_pad // LANES
    anc_np = np.full((4, A_pad), 2.0, dtype=np.float32)
    anc_np[:, :A] = anchs.T
    anc_tile = jnp.asarray(anc_np.reshape(4, S, LANES))

    # cthw form of the anchors (only gathered at the 2 selected indices).
    anc_cthw = np.concatenate(
        [(anchs[:, :2] + anchs[:, 2:]) * 0.5, anchs[:, 2:] - anchs[:, :2]], axis=1)
    anc_cthw = jnp.asarray(anc_cthw)

    acc, maxpos, boxes, scores = _device_eval(
        att_box, reg_box, annot, img_size, anc_tile, anc_cthw,
        acc_thr=float(cfg['acc_iou_threshold']))

    return {'Acc': acc, 'MaxPos': maxpos, 'idxs': inp['idxs'],
            'pred_boxes': boxes, 'pred_scores': scores}


# ----------------------------------------------------------------------------
# Pure-NumPy reference (for correctness check)
# ----------------------------------------------------------------------------
def evaluator_reference(out, inp, *, ratios, scales, cfg):
    att = np.asarray(out['att_out'], np.float32)
    reg = np.asarray(out['bbx_out'], np.float32)
    annot = np.asarray(inp['annot'], np.float32)
    img_size = np.asarray(inp['img_size'], np.float32)
    nf = int(np.asarray(out['num_f_out']).reshape(-1)[0])
    anchs = create_anchors(np.asarray(out['feat_sizes'])[:nf], ratios, scales)
    B = att.shape[0]

    att_sig = 1.0 / (1.0 + np.exp(-att[..., 0]))
    att_best = att_sig.max(1)
    att_ids = att_sig.argmax(1)

    def iou_mat(b1, b2):
        tl = np.maximum(b1[:, None, :2], b2[None, :, :2])
        br = np.minimum(b1[:, None, 2:], b2[None, :, 2:])
        sz = np.clip(br - tl, 0, None)
        inter = sz[..., 0] * sz[..., 1]
        a1 = (b1[:, 2] - b1[:, 0]) * (b1[:, 3] - b1[:, 1])
        a2 = (b2[:, 2] - b2[:, 0]) * (b2[:, 3] - b2[:, 1])
        return inter / (a1[:, None] + a2[None, :] - inter + 1e-8)

    exp_ids = iou_mat(annot, anchs).argmax(1)

    c = (anchs[:, :2] + anchs[:, 2:]) / 2.0
    s = anchs[:, 2:] - anchs[:, :2]
    b0 = reg[..., :2] * s + c
    b1 = np.exp(reg[..., 2:]) * s
    actual = np.concatenate([b0 - b1 / 2.0, b0 + b1 / 2.0], axis=-1)

    def eval_res(ids):
        bb = actual[np.arange(B), ids]
        ious = np.diag(iou_mat(bb, annot))
        return (ious >= cfg['acc_iou_threshold']).astype(np.float32).mean(), bb

    maxpos, _ = eval_res(exp_ids)
    acc, pred = eval_res(att_ids)
    scaled = (pred + 1.0) / 2.0 * np.concatenate([img_size, img_size], axis=1)
    return acc, maxpos, scaled[:, [1, 0, 3, 2]], att_best


# ----------------------------------------------------------------------------
if __name__ == "__main__":
    key = jax.random.PRNGKey(0)
    ratios = [0.5, 1.0, 2.0]
    scales = [1.0, 2.0 ** (1.0 / 3.0), 2.0 ** (2.0 / 3.0)]
    cfg = {'alpha': 0.25, 'gamma': 2.0, 'use_focal': True, 'use_softmax': False,
           'use_multi': False, 'lamb_reg': 1.0, 'acc_iou_threshold': 0.5}

    feat_sizes = np.array([[4, 4], [2, 2], [1, 1]], dtype=np.int32)
    num_f_out = np.array([3], dtype=np.int32)
    A = int(sum(int(h) * int(w) for h, w in feat_sizes)) * len(ratios) * len(scales)
    B = 2

    k1, k2 = jax.random.split(key)
    att_out = jax.random.normal(k1, (B, A, 1), dtype=jnp.float32)
    bbx_out = 0.1 * jax.random.normal(k2, (B, A, 4), dtype=jnp.float32)
    annot = jnp.array([[-0.5, -0.5, 0.5, 0.5],
                       [-0.2, -0.6, 0.7, 0.3]], dtype=jnp.float32)
    img_size = jnp.array([[256.0, 256.0], [300.0, 400.0]], dtype=jnp.float32)
    idxs = jnp.arange(B, dtype=jnp.int32)

    out = {'att_out': att_out, 'bbx_out': bbx_out,
           'feat_sizes': feat_sizes, 'num_f_out': num_f_out}
    inp = {'annot': annot, 'img_size': img_size, 'idxs': idxs}

    res = evaluator_forward(out, inp, ratios=ratios, scales=scales, cfg=cfg)
    jax.block_until_ready(res['Acc'])

    r_acc, r_maxpos, r_boxes, r_scores = evaluator_reference(
        out, inp, ratios=ratios, scales=scales, cfg=cfg)
    assert np.allclose(np.asarray(res['pred_scores']), r_scores, atol=1e-5)
    assert np.allclose(np.asarray(res['pred_boxes']), r_boxes, rtol=1e-4, atol=1e-2)
    assert abs(float(res['Acc']) - float(r_acc)) < 1e-6
    assert abs(float(res['MaxPos']) - float(r_maxpos)) < 1e-6

    print("KERNEL_OK")
</pallas_src>

<mosaic_0001>
module attributes {stable_mosaic.version = 11 : i64} {
  func.func @_evaluator_kernel(%arg0: i32, %arg1: memref<1x1x189xf32, #tpu.memory_space<vmem>>, %arg2: memref<4x8x128xf32, #tpu.memory_space<vmem>>, %arg3: memref<8xf32, #tpu.memory_space<smem>>, %arg4: memref<1x1x128xf32, #tpu.memory_space<vmem>>, %arg5: memref<1x2x128xi32, #tpu.memory_space<vmem>>) attributes {dimension_semantics = [#tpu.dimension_semantics<parallel>], iteration_bounds = array<i64: 2>, scalar_prefetch = 0 : i64, scratch_operands = 0 : i64, tpu.core_type = #tpu.core_type<tc>, window_params = [{transform_indices = @transform_0, window_bounds = array<i64: 1, 1, 189>}, {pipeline_mode = #tpu.pipeline_mode<synchronous>, transform_indices = @transform_1, window_bounds = array<i64: 4, 8, 128>}, {transform_indices = @transform_2, window_bounds = array<i64: 8>}, {transform_indices = @transform_3, window_bounds = array<i64: 1, 1, 128>}, {transform_indices = @transform_4, window_bounds = array<i64: 1, 2, 128>}]} {
    %c0 = arith.constant 0 : index
    %c0_0 = arith.constant 0 : index
    %c0_1 = arith.constant 0 : index
    %0 = vector.load %arg1[%c0, %c0_0, %c0_1] : memref<1x1x189xf32, #tpu.memory_space<vmem>>, vector<1x1x189xf32>
    %1 = vector.shape_cast %0 : vector<1x1x189xf32> to vector<1x189xf32>
    %2 = tpu.iota {dimensions = array<i32: 1>} : vector<1x189xi32>
    %3 = vector.shape_cast %1 : vector<1x189xf32> to vector<1x1x189xf32>
    %cst = arith.constant dense<0xFF800000> : vector<1xf32>
    %4 = vector.multi_reduction <maximumf>, %3, %cst [1, 2] : vector<1x1x189xf32> to vector<1xf32>
    %5 = vector.shape_cast %4 : vector<1xf32> to vector<1x1x1xf32>
    %6 = vector.extract %5[0, 0, 0] : f32 from vector<1x1x1xf32>
    %7 = vector.broadcast %6 : f32 to vector<1x189xf32>
    %8 = arith.cmpf oeq, %1, %7 : vector<1x189xf32>
    %c189_i32 = arith.constant 189 : i32
    %9 = vector.broadcast %c189_i32 : i32 to vector<1x189xi32>
    %10 = arith.select %8, %2, %9 : vector<1x189xi1>, vector<1x189xi32>
    %11 = vector.shape_cast %10 : vector<1x189xi32> to vector<1x1x189xi32>
    %cst_2 = arith.constant dense<2147483647> : vector<1xi32>
    %12 = vector.multi_reduction <minsi>, %11, %cst_2 [1, 2] : vector<1x1x189xi32> to vector<1xi32>
    %13 = vector.shape_cast %12 : vector<1xi32> to vector<1x1x1xi32>
    %14 = vector.extract %13[0, 0, 0] : i32 from vector<1x1x1xi32>
    %c0_3 = arith.constant 0 : index
    %c0_4 = arith.constant 0 : index
    %c0_5 = arith.constant 0 : index
    %15 = vector.load %arg2[%c0_3, %c0_4, %c0_5] : memref<4x8x128xf32, #tpu.memory_space<vmem>>, vector<1x8x128xf32>
    %16 = vector.shape_cast %15 : vector<1x8x128xf32> to vector<8x128xf32>
    %c1 = arith.constant 1 : index
    %c0_6 = arith.constant 0 : index
    %c0_7 = arith.constant 0 : index
    %17 = vector.load %arg2[%c1, %c0_6, %c0_7] : memref<4x8x128xf32, #tpu.memory_space<vmem>>, vector<1x8x128xf32>
    %18 = vector.shape_cast %17 : vector<1x8x128xf32> to vector<8x128xf32>
    %c2 = arith.constant 2 : index
    %c0_8 = arith.constant 0 : index
    %c0_9 = arith.constant 0 : index
    %19 = vector.load %arg2[%c2, %c0_8, %c0_9] : memref<4x8x128xf32, #tpu.memory_space<vmem>>, vector<1x8x128xf32>
    %20 = vector.shape_cast %19 : vector<1x8x128xf32> to vector<8x128xf32>
    %c3 = arith.constant 3 : index
    %c0_10 = arith.constant 0 : index
    %c0_11 = arith.constant 0 : index
    %21 = vector.load %arg2[%c3, %c0_10, %c0_11] : memref<4x8x128xf32, #tpu.memory_space<vmem>>, vector<1x8x128xf32>
    %22 = vector.shape_cast %21 : vector<1x8x128xf32> to vector<8x128xf32>
    %c4_i32 = arith.constant 4 : i32
    %23 = arith.muli %c4_i32, %arg0 : i32
    %c0_i32 = arith.constant 0 : i32
    %24 = arith.addi %23, %c0_i32 : i32
    %25 = arith.index_cast %24 : i32 to index
    %26 = memref.load %arg3[%25] : memref<8xf32, #tpu.memory_space<smem>>
    %c4_i32_12 = arith.constant 4 : i32
    %27 = arith.muli %c4_i32_12, %arg0 : i32
    %c1_i32 = arith.constant 1 : i32
    %28 = arith.addi %27, %c1_i32 : i32
    %29 = arith.index_cast %28 : i32 to index
    %30 = memref.load %arg3[%29] : memref<8xf32, #tpu.memory_space<smem>>
    %c4_i32_13 = arith.constant 4 : i32
    %31 = arith.muli %c4_i32_13, %arg0 : i32
    %c2_i32 = arith.constant 2 : i32
    %32 = arith.addi %31, %c2_i32 : i32
    %33 = arith.index_cast %32 : i32 to index
    %34 = memref.load %arg3[%33] : memref<8xf32, #tpu.memory_space<smem>>
    %c4_i32_14 = arith.constant 4 : i32
    %35 = arith.muli %c4_i32_14, %arg0 : i32
    %c3_i32 = arith.constant 3 : i32
    %36 = arith.addi %35, %c3_i32 : i32
    %37 = arith.index_cast %36 : i32 to index
    %38 = memref.load %arg3[%37] : memref<8xf32, #tpu.memory_space<smem>>
    %39 = arith.subf %34, %26 : f32
    %40 = arith.subf %38, %30 : f32
    %41 = arith.mulf %39, %40 : f32
    %42 = vector.broadcast %34 : f32 to vector<8x128xf32>
    %43 = arith.minimumf %42, %20 : vector<8x128xf32>
    %44 = vector.broadcast %26 : f32 to vector<8x128xf32>
    %45 = arith.maximumf %44, %16 : vector<8x128xf32>
    %46 = arith.subf %43, %45 : vector<8x128xf32>
    %cst_15 = arith.constant 0.000000e+00 : f32
    %47 = vector.broadcast %cst_15 : f32 to vector<8x128xf32>
    %48 = arith.maximumf %46, %47 : vector<8x128xf32>
    %49 = vector.broadcast %38 : f32 to vector<8x128xf32>
    %50 = arith.minimumf %49, %22 : vector<8x128xf32>
    %51 = vector.broadcast %30 : f32 to vector<8x128xf32>
    %52 = arith.maximumf %51, %18 : vector<8x128xf32>
    %53 = arith.subf %50, %52 : vector<8x128xf32>
    %cst_16 = arith.constant 0.000000e+00 : f32
    %54 = vector.broadcast %cst_16 : f32 to vector<8x128xf32>
    %55 = arith.maximumf %53, %54 : vector<8x128xf32>
    %56 = arith.mulf %48, %55 : vector<8x128xf32>
    %57 = arith.subf %20, %16 : vector<8x128xf32>
    %58 = arith.subf %22, %18 : vector<8x128xf32>
    %59 = arith.mulf %57, %58 : vector<8x128xf32>
    %60 = vector.broadcast %41 : f32 to vector<8x128xf32>
    %61 = arith.addf %60, %59 : vector<8x128xf32>
    %62 = arith.subf %61, %56 : vector<8x128xf32>
    %cst_17 = arith.constant 9.99999993E-9 : f32
    %63 = vector.broadcast %cst_17 : f32 to vector<8x128xf32>
    %64 = arith.addf %62, %63 : vector<8x128xf32>
    %65 = arith.divf %56, %64 : vector<8x128xf32>
    %66 = tpu.iota {dimensions = array<i32: 0>} : vector<8x128xi32>
    %67 = tpu.iota {dimensions = array<i32: 1>} : vector<8x128xi32>
    %c128_i32 = arith.constant 128 : i32
    %68 = vector.broadcast %c128_i32 : i32 to vector<8x128xi32>
    %69 = arith.muli %66, %68 : vector<8x128xi32>
    %70 = arith.addi %69, %67 : vector<8x128xi32>
    %71 = vector.shape_cast %65 : vector<8x128xf32> to vector<1x8x128xf32>
    %cst_18 = arith.constant dense<0xFF800000> : vector<1xf32>
    %72 = vector.multi_reduction <maximumf>, %71, %cst_18 [1, 2] : vector<1x8x128xf32> to vector<1xf32>
    %73 = vector.shape_cast %72 : vector<1xf32> to vector<1x1x1xf32>
    %74 = vector.extract %73[0, 0, 0] : f32 from vector<1x1x1xf32>
    %75 = vector.broadcast %74 : f32 to vector<8x128xf32>
    %76 = arith.cmpf oeq, %65, %75 : vector<8x128xf32>
    %c1024_i32 = arith.constant 1024 : i32
    %77 = vector.broadcast %c1024_i32 : i32 to vector<8x128xi32>
    %78 = arith.select %76, %70, %77 : vector<8x128xi1>, vector<8x128xi32>
    %79 = vector.shape_cast %78 : vector<8x128xi32> to vector<1x8x128xi32>
    %cst_19 = arith.constant dense<2147483647> : vector<1xi32>
    %80 = vector.multi_reduction <minsi>, %79, %cst_19 [1, 2] : vector<1x8x128xi32> to vector<1xi32>
    %81 = vector.shape_cast %80 : vector<1xi32> to vector<1x1x1xi32>
    %82 = vector.extract %81[0, 0, 0] : i32 from vector<1x1x1xi32>
    %cst_20 = arith.constant 0.000000e+00 : f32
    %83 = vector.broadcast %cst_20 : f32 to vector<1x128xf32>
    %84 = vector.broadcast %6 : f32 to vector<1x128xf32>
    %85 = arith.addf %83, %84 : vector<1x128xf32>
    %c0_21 = arith.constant 0 : index
    %c0_22 = arith.constant 0 : index
    %c0_23 = arith.constant 0 : index
    %86 = vector.load %arg4[%c0_21, %c0_22, %c0_23] : memref<1x1x128xf32, #tpu.memory_space<vmem>>, vector<1x1x128xf32>
    %87 = vector.shape_cast %86 : vector<1x1x128xf32> to vector<1x128xf32>
    %88 = vector.shape_cast %85 : vector<1x128xf32> to vector<1x1x128xf32>
    tpu.vector_store %arg4[%c0_21, %c0_22, %c0_23], %88 {strides = array<i32>} : memref<1x1x128xf32, #tpu.memory_space<vmem>>, vector<1x1x128xf32>,
    %89 = tpu.iota {dimensions = array<i32: 0>} : vector<2x128xi32>
    %c0_i32_24 = arith.constant 0 : i32
    %90 = vector.broadcast %c0_i32_24 : i32 to vector<2x128xi32>
    %91 = arith.cmpi eq, %89, %90 : vector<2x128xi32>
    %92 = vector.broadcast %14 : i32 to vector<2x128xi32>
    %93 = vector.broadcast %82 : i32 to vector<2x128xi32>
    %94 = arith.select %91, %92, %93 : vector<2x128xi1>, vector<2x128xi32>
    %c0_25 = arith.constant 0 : index
    %c0_26 = arith.constant 0 : index
    %c0_27 = arith.constant 0 : index
    %95 = vector.load %arg5[%c0_25, %c0_26, %c0_27] : memref<1x2x128xi32, #tpu.memory_space<vmem>>, vector<1x2x128xi32>
    %96 = vector.shape_cast %95 : vector<1x2x128xi32> to vector<2x128xi32>
    %97 = vector.shape_cast %94 : vector<2x128xi32> to vector<1x2x128xi32>
    tpu.vector_store %arg5[%c0_25, %c0_26, %c0_27], %97 {strides = array<i32>} : memref<1x2x128xi32, #tpu.memory_space<vmem>>, vector<1x2x128xi32>,
    return
  }
  func.func @transform_0(%arg0: i32) -> (i32, i32, i32) {
    %c0_i32 = arith.constant 0 : i32
    %c0_i32_0 = arith.constant 0 : i32
    %c0_i32_1 = arith.constant 0 : i32
    return %arg0, %c0_i32, %c0_i32_0 : i32, i32, i32
  }
  func.func @transform_1(%arg0: i32) -> (i32, i32, i32) {
    %c0_i32 = arith.constant 0 : i32
    %c0_i32_0 = arith.constant 0 : i32
    %c0_i32_1 = arith.constant 0 : i32
    %c0_i32_2 = arith.constant 0 : i32
    return %c0_i32, %c0_i32_0, %c0_i32_1 : i32, i32, i32
  }
  func.func @transform_2(%arg0: i32) -> i32 {
    %c0_i32 = arith.constant 0 : i32
    %c0_i32_0 = arith.constant 0 : i32
    return %c0_i32 : i32
  }
  func.func @transform_3(%arg0: i32) -> (i32, i32, i32) {
    %c0_i32 = arith.constant 0 : i32
    %c0_i32_0 = arith.constant 0 : i32
    %c0_i32_1 = arith.constant 0 : i32
    return %arg0, %c0_i32, %c0_i32_0 : i32, i32, i32
  }
  func.func @transform_4(%arg0: i32) -> (i32, i32, i32) {
    %c0_i32 = arith.constant 0 : i32
    %c0_i32_0 = arith.constant 0 : i32
    %c0_i32_1 = arith.constant 0 : i32
    return %arg0, %c0_i32, %c0_i32_0 : i32, i32, i32
  }
}

</mosaic_0001>

<llo_original>
// kernel: _device_eval.1
$region0: #{_device_eval.1}
  #allocation0 [shape = 'u32[]', space=smem, size = 0x4, offset = 0x4, fixed_abs, tag = 'smem constant byte address 0x4 - core index']
  #allocation1 [shape = 'u32[144,128]{1,0:T(1,128)}', space=vmem, size = 0x12000, scoped, tag = 'internal scratch']
  %s0 = inlined_call_operand.vmem [shape: f32[2,1,189], index: 0, kind: input, shape index: {}]
  %s1 = inlined_call_operand.hbm [shape: f32[4,8,128], index: 1, kind: input, shape index: {}]
  %s2 = inlined_call_operand.vmem [shape: f32[8], index: 2, kind: input, shape index: {}]
  %s3 = inlined_call_operand.vmem [shape: f32[2,1,128], index: 3, kind: output, shape index: {0}]
  %s4 = inlined_call_operand.vmem [shape: s32[2,2,128], index: 4, kind: output, shape index: {1}]
  %5 = xla_tuple %s3, %s4
  %s6 = sld [smem:[#allocation0]]
  $region61: #{_device_eval.1} parent=0
    _
  %s8 = ssub.s32 1, %s6
  %s9 = scalar_select 0, %s8, %s6
  $region1: #{_device_eval.1} parent=0
    #allocation2 [shape = 'u8[16384]{0}', space=vmem, size = 0x4000, scoped, tag = 'input window, operand 1, single buffered']
    #allocation3 [shape = 's32[2]{0}', space=sflag, size = 0x8, scoped, tag = 'scoped memory for _device_eval.1']
    #allocation4 [shape = 's32[2]{0}', space=sflag, size = 0x8, scoped, tag = 'scoped memory for _device_eval.1']
    #allocation5 [shape = 'u8[512]{0}', space=smem, size = 0x200, scoped, tag = 'input window, operand 2, single buffered']
    %10 = vsyncpa [#allocation3], 0
    %11 = vsyncpa [#allocation4], 0
    loop: start=0, step=1, limit=4
    $region2: #{_device_eval.1} parent=1 // loop_pre_header
      _
    $region3: #{_device_eval.1} parent=1 // loop_header
      %s13 = sphi 0, %s17
      %p14 = scmp.ge.s32.totalorder %s13, 4
      %s23 = sphi 0, %s25
      %s26 = sphi 0, %s23
      %s27 = sphi 0, %s26
      %s43 = sphi 0, %s27
      %s47 = sphi 0, %s47
      %s49 = sphi 0, %s47
      %s50 = sphi 0, %s49
      %s64 = sphi 0, %s50
      %s68 = sphi 0, %s68
      %s70 = sphi 0, %s68
      %s71 = sphi 0, %s70
      %s85 = sphi 0, %s71
      %s91 = sphi 0, %s93
      %s94 = sphi 0, %s91
      %s95 = sphi 0, %s94
      %s111 = sphi 0, %s95
      %s117 = sphi 0, %s119
      %s120 = sphi 0, %s117
      %s121 = sphi 0, %s120
      %s137 = sphi 0, %s121
    $region4: #{_device_eval.1} parent=1 // loop_header_branch
      %16 = sbr.rel (%p14) target = $region8
    $region5: #{_device_eval.1} parent=1 // loop_body
      %s18 = ssub.s32 %s13, 1
      %s19 = ssub.s32 %s13, 2
      %s20 = sadd.s32 %s13, 1
      %s21 = ssub.s32 %s13, %s20
      %p22 = scmp.eq.s32.totalorder %s21, 0
      %s24 = sadd.s32 %s23, 1
      %s25 = scalar_select %p22, %s23, %s24
      %p28 = pneg %p22
      %p29 = scmp.eq.s32.totalorder %s13, 1
      %p30 = por %p28, %p29
      %p31 = scmp.ne.s32.totalorder %s23, %s26
      %p32 = scmp.eq.s32.totalorder %s13, 0
      %p33 = por %p31, %p32
      %p34 = scmp.ne.s32.totalorder %s23, %s26
      %p35 = scmp.eq.s32.totalorder %s18, 1
      %p36 = por %p34, %p35
      %p37 = scmp.ne.s32.totalorder %s26, %s27
      %p38 = scmp.eq.s32.totalorder %s18, 0
      %p39 = por %p37, %p38
      %p40 = scmp.ne.s32.totalorder %s26, %s27
      %p41 = scmp.eq.s32.totalorder %s19, 1
      %p42 = por %p40, %p41
      %p44 = scmp.ne.s32.totalorder %s27, %s43
      %p45 = scmp.eq.s32.totalorder %s19, 0
      %p46 = por %p44, %p45
      %s48 = sadd.s32 %s47, 1
      %p51 = scmp.eq.s32.totalorder %s13, 1
      %p52 = scmp.ne.s32.totalorder %s47, %s49
      %p53 = scmp.eq.s32.totalorder %s13, 0
      %p54 = por %p52, %p53
      %p55 = scmp.ne.s32.totalorder %s47, %s49
      %p56 = scmp.eq.s32.totalorder %s18, 1
      %p57 = por %p55, %p56
      %p58 = scmp.ne.s32.totalorder %s49, %s50
      %p59 = scmp.eq.s32.totalorder %s18, 0
      %p60 = por %p58, %p59
      %p61 = scmp.ne.s32.totalorder %s49, %s50
      %p62 = scmp.eq.s32.totalorder %s19, 1
      %p63 = por %p61, %p62
      %p65 = scmp.ne.s32.totalorder %s50, %s64
      %p66 = scmp.eq.s32.totalorder %s19, 0
      %p67 = por %p65, %p66
      %s69 = sadd.s32 %s68, 1
      %p72 = scmp.eq.s32.totalorder %s13, 1
      %p73 = scmp.ne.s32.totalorder %s68, %s70
      %p74 = scmp.eq.s32.totalorder %s13, 0
      %p75 = por %p73, %p74
      %p76 = scmp.ne.s32.totalorder %s68, %s70
      %p77 = scmp.eq.s32.totalorder %s18, 1
      %p78 = por %p76, %p77
      %p79 = scmp.ne.s32.totalorder %s70, %s71
      %p80 = scmp.eq.s32.totalorder %s18, 0
      %p81 = por %p79, %p80
      %p82 = scmp.ne.s32.totalorder %s70, %s71
      %p83 = scmp.eq.s32.totalorder %s19, 1
      %p84 = por %p82, %p83
      %p86 = scmp.ne.s32.totalorder %s71, %s85
      %p87 = scmp.eq.s32.totalorder %s19, 0
      %p88 = por %p86, %p87
      %s89 = ssub.s32 %s13, %s20
      %p90 = scmp.eq.s32.totalorder %s89, 0
      %s92 = sadd.s32 %s91, 1
      %s93 = scalar_select %p90, %s91, %s92
      %p96 = pneg %p90
      %p97 = scmp.eq.s32.totalorder %s13, 1
      %p98 = por %p96, %p97
      %p99 = scmp.ne.s32.totalorder %s91, %s94
      %p100 = scmp.eq.s32.totalorder %s13, 0
      %p101 = por %p99, %p100
      %p102 = scmp.ne.s32.totalorder %s91, %s94
      %p103 = scmp.eq.s32.totalorder %s18, 1
      %p104 = por %p102, %p103
      %p105 = scmp.ne.s32.totalorder %s94, %s95
      %p106 = scmp.eq.s32.totalorder %s18, 0
      %p107 = por %p105, %p106
      %p108 = scmp.ne.s32.totalorder %s94, %s95
      %p109 = scmp.eq.s32.totalorder %s19, 1
      %p110 = por %p108, %p109
      %p112 = scmp.ne.s32.totalorder %s95, %s111
      %p113 = scmp.eq.s32.totalorder %s19, 0
      %p114 = por %p112, %p113
      %s115 = ssub.s32 %s13, %s20
      %p116 = scmp.eq.s32.totalorder %s115, 0
      %s118 = sadd.s32 %s117, 1
      %s119 = scalar_select %p116, %s117, %s118
      %p122 = pneg %p116
      %p123 = scmp.eq.s32.totalorder %s13, 1
      %p124 = por %p122, %p123
      %p125 = scmp.ne.s32.totalorder %s117, %s120
      %p126 = scmp.eq.s32.totalorder %s13, 0
      %p127 = por %p125, %p126
      %p128 = scmp.ne.s32.totalorder %s117, %s120
      %p129 = scmp.eq.s32.totalorder %s18, 1
      %p130 = por %p128, %p129
      %p131 = scmp.ne.s32.totalorder %s120, %s121
      %p132 = scmp.eq.s32.totalorder %s18, 0
      %p133 = por %p131, %p132
      %p134 = scmp.ne.s32.totalorder %s120, %s121
      %p135 = scmp.eq.s32.totalorder %s19, 1
      %p136 = por %p134, %p135
      %p138 = scmp.ne.s32.totalorder %s121, %s137
      %p139 = scmp.eq.s32.totalorder %s19, 0
      %p140 = por %p138, %p139
      %p141 = scmp.le.s32.totalorder 1, %s13
      %p142 = scmp.lt.s32.totalorder %s13, 3
      %p143 = pnand %p141, %p142
      %p144 = pneg %p143
      // Predicated region
      $region9: #{_device_eval.1} parent=5 // pred_check
        _
      $region10: #{_device_eval.1} parent=5 // pred_check_branch
        %146 = sbr.rel (%p143) target = $region12
      $region11: #{_device_eval.1} parent=5 // pred_region
        %s147 = ssub.s32 %s13, 1
        // Predicated region
        $region13: #{_device_eval.1} parent=11 // pred_check
          %p148 = pneg %p60
        $region14: #{_device_eval.1} parent=11 // pred_check_branch
          %150 = sbr.rel (%p148) target = $region16
        $region15: #{_device_eval.1} parent=11 // pred_region
          %s152 = ssub.s32 512, 512
          %153 = vsyncadd [#allocation3], %s152
          %s154 = sshll.u32 [#allocation2], 4
          %s155 = int_to_ptr.vmem [resolvable:$true] %s154
          %160 = dma.hbm_to_vmem [thread:$0]  %s1, 512, %s155, [#allocation3], 128, 128, 8
        $region16: #{_device_eval.1} parent=11 // pred_fallthru
          _
        // Predicated region
        $region17: #{_device_eval.1} parent=11 // pred_check
          %p161 = pneg %p81
        $region18: #{_device_eval.1} parent=11 // pred_check_branch
          %163 = sbr.rel (%p161) target = $region20
        $region19: #{_device_eval.1} parent=11 // pred_region
          %s165 = ssub.s32 16, 16
          %166 = vsyncadd [#allocation4], %s165
          %s168 = sshll.u32 %s2, 4
          %s169 = int_to_ptr.vmem [resolvable:$true] %s168
          %171 = dma.vmem_to_smem %s169, 16, [#allocation5], [#allocation4]
        $region20: #{_device_eval.1} parent=11 // pred_fallthru
          _
      $region12: #{_device_eval.1} parent=5 // pred_fallthru
        _
      %p172 = scmp.lt.s32.totalorder %s13, 2
      // Predicated region
      $region21: #{_device_eval.1} parent=5 // pred_check
        %p173 = pneg %p172
      $region22: #{_device_eval.1} parent=5 // pred_check_branch
        %175 = sbr.rel (%p173) target = $region24
      $region23: #{_device_eval.1} parent=5 // pred_region
        // Predicated region
        $region25: #{_device_eval.1} parent=23 // pred_check
          %p176 = pneg %p33
        $region26: #{_device_eval.1} parent=23 // pred_check_branch
          %178 = sbr.rel (%p176) target = $region28
        $region27: #{_device_eval.1} parent=23 // pred_region
          %p179 = scmp.lt.s32.totalorder %s13, 1
          %s180 = scalar_select %p179, %s13, 1
          %s181 = smul.addr %s180, 2
          %s182 = scalar_lea.vmem %s0, %s181
        $region28: #{_device_eval.1} parent=23 // pred_fallthru
          _
      $region24: #{_device_eval.1} parent=5 // pred_fallthru
        _
      %p183 = scmp.le.s32.totalorder 1, %s13
      %p184 = scmp.lt.s32.totalorder %s13, 3
      %p185 = pnand %p183, %p184
      %p186 = pneg %p185
      // Predicated region
      $region29: #{_device_eval.1} parent=5 // pred_check
        _
      $region30: #{_device_eval.1} parent=5 // pred_check_branch
        %188 = sbr.rel (%p185) target = $region32
      $region31: #{_device_eval.1} parent=5 // pred_region
        %s189 = ssub.s32 %s13, 1
        // Predicated region
        $region33: #{_device_eval.1} parent=31 // pred_check
          %p190 = pneg %p60
        $region34: #{_device_eval.1} parent=31 // pred_check_branch
          %192 = sbr.rel (%p190) target = $region36
        $region35: #{_device_eval.1} parent=31 // pred_region
          %193 = dma.done [#allocation3], 512
        $region36: #{_device_eval.1} parent=31 // pred_fallthru
          _
        // Predicated region
        $region37: #{_device_eval.1} parent=31 // pred_check
          %p194 = pneg %p81
        $region38: #{_device_eval.1} parent=31 // pred_check_branch
          %196 = sbr.rel (%p194) target = $region40
        $region39: #{_device_eval.1} parent=31 // pred_region
          %197 = dma.done [#allocation4], 16
        $region40: #{_device_eval.1} parent=31 // pred_fallthru
          _
        %198 = sfence
        %p199 = scmp.lt.s32.totalorder %s18, 1
        %s200 = scalar_select %p199, %s18, 1
        %s201 = smul.addr %s200, 2
        %s202 = scalar_lea.vmem %s0, %s201
        %p203 = pneg %p39
        %p204 = pneg %p36
        %p205 = pneg %p60
        %p206 = pneg %p57
        %p207 = pneg %p81
        %p208 = pneg %p78
        %p209 = pneg %p107
        %p210 = pneg %p104
        %p211 = scmp.lt.s32.totalorder %s18, 1
        %s212 = scalar_select %p211, %s18, 1
        %s213 = scalar_lea.vmem %s3, %s212
        %p214 = pneg %p133
        %p215 = pneg %p130
        %p216 = scmp.lt.s32.totalorder %s18, 1
        %s217 = scalar_select %p216, %s18, 1
        %s218 = smul.addr %s217, 2
        %s219 = scalar_lea.vmem %s4, %s218
        %p220 = scmp.lt.s32.totalorder %s18, 1
        %s221 = scalar_select %p220, %s18, 1
        %s222 = smul.addr %s221, 2
        %s223 = scalar_lea.vmem %s0, %s222
        %p224 = scmp.lt.s32.totalorder %s18, 1
        %s225 = scalar_select %p224, %s18, 1
        %s226 = scalar_lea.vmem %s3, %s225
        %p227 = scmp.lt.s32.totalorder %s18, 1
        %s228 = scalar_select %p227, %s18, 1
        %s229 = smul.addr %s228, 2
        %s230 = scalar_lea.vmem %s4, %s229
        %v231 = vld [vmem:[%s223] sm:$0x3]
        %v232 = vlaneseq
        %v233 = vand.u32 %v232, 127
        %v234 = vadd.s32 %v233, 128
        %v236 = vlaneseq
        %v237 = vshrl.u32 %v236, 7
        %v238 = vsub.s32 0, %v237
        %v239 = vrot.slane %v231, %v238
        %v240 = vlaneseq
        %v241 = vshrl.u32 %v240, 7
        %v242 = vsub.s32 1, %v241
        %v243 = vrot.slane %v231, %v242
        %vm246 = vcmask 1040384
        %v247 = vsel %vm246, %v239, -inf
        %vm248 = vcmask 491520
        %v249 = vsel %vm248, %v243, -inf
        %v250 = vmax.f32 %v247, %v249
        %251 = vmax.xlane.f32.xlu0 %v250
        %v252 = vpop.xlane.xlu0 %251
        %v253 = vrot.slane %v252, 4
        %v254 = vmax.f32 %v252, %v253
        %v255 = vrot.slane %v254, 2
        %v256 = vmax.f32 %v254, %v255
        %v257 = vrot.slane %v256, 1
        %v258 = vmax.f32 %v256, %v257
        %s259 = vtos %v258
        %v260 = vstv %s259
        %vm261 = vcmp.eq.f32.partialorder %v231, %v260
        %v262 = vcombine.low %v233, %v234
        %v264 = vunpack.c.l.s4 1966171168
        %v265 = vunpack.c.0.s8 %v264
        %v266 = vlaneseq
        %v267 = vshrl.u32 %v266, 7
        %v268 = vsub.s32 %v265, %v267
        %v269 = vrot.slane %v262, %v268
        %v271 = vunpack.c.l.s4 1966171168
        %v272 = vunpack.c.0.s8 %v271
        %v273 = vlaneseq
        %v274 = vshrl.u32 %v273, 7
        %v275 = vsub.s32 %v272, %v274
        %v276 = vrot.slane %v269, %v275
        %v277 = vsel %vm261, %v276, 189
        %v278 = vlaneseq
        %v279 = vshrl.u32 %v278, 7
        %v280 = vsub.s32 0, %v279
        %v281 = vrot.slane %v277, %v280
        %v282 = vlaneseq
        %v283 = vshrl.u32 %v282, 7
        %v284 = vsub.s32 1, %v283
        %v285 = vrot.slane %v277, %v284
        %v286 = vsel %vm246, %v281, 2147483647
        %v287 = vsel %vm248, %v285, 2147483647
        %vm288 = vcmp.lt.s32.totalorder %v286, %v287
        %v289 = vsel %vm288, %v286, %v287
        %v290 = vand.u32 %v289, 65535
        %v291 = vshra.s32 %v289, 16
        %v292 = vcvt.s32.f32 %v290
        %v293 = vcvt.s32.f32 %v291
        %294 = vmin.xlane.f32.xlu0 %v293
        %v295 = vpop.xlane.xlu0 %294
        %vm296 = vcmp.eq.f32.partialorder %v293, %v295
        %v297 = vsel %vm296, %v292, inf
        %298 = vmin.xlane.f32.xlu0 %v297
        %v299 = vpop.xlane.xlu0 %298
        %v300 = vcvt.f32.s32 %v299
        %v301 = vcvt.f32.s32 %v295
        %v302 = vshll.u32 %v301, 16
        %v303 = vadd.s32 %v302, %v300
        %v304 = vrot.slane %v303, 4
        %vm305 = vcmp.lt.s32.totalorder %v303, %v304
        %v306 = vsel %vm305, %v303, %v304
        %v307 = vrot.slane %v306, 2
        %vm308 = vcmp.lt.s32.totalorder %v306, %v307
        %v309 = vsel %vm308, %v306, %v307
        %v310 = vrot.slane %v309, 1
        %vm311 = vcmp.lt.s32.totalorder %v309, %v310
        %v312 = vsel %vm311, %v309, %v310
        %s313 = vtos %v312
        %v314 = vld [vmem:[#allocation2] sm:$0xff]
        %s315 = scalar_lea.vmem [#allocation2], 8
        %v316 = vld [vmem:[%s315] sm:$0xff]
        %s317 = scalar_lea.vmem [#allocation2], 16
        %v318 = vld [vmem:[%s317] sm:$0xff]
        %s319 = scalar_lea.vmem [#allocation2], 24
        %v320 = vld [vmem:[%s319] sm:$0xff]
        %s321 = smul.u32 %s18, 4
        %s322 = sld [smem:[#allocation5 + %s321]]
        %s323 = sadd.s32 %s321, 1
        %s324 = sld [smem:[#allocation5 + %s323]]
        %s325 = sadd.s32 %s321, 2
        %s326 = sld [smem:[#allocation5 + %s325]]
        %s327 = sadd.s32 %s321, 3
        %s328 = sld [smem:[#allocation5 + %s327]]
        %s329 = ssub.f32 %s326, %s322
        %s330 = ssub.f32 %s328, %s324
        %s331 = smul.f32 %s329, %s330
        %v332 = vstv %s326
        %v333 = vmin.f32 %v332, %v318
        %v334 = vstv %s322
        %v335 = vmax.f32 %v334, %v314
        %v336 = vsub.f32 %v333, %v335
        %v337 = vmax.f32 %v336, 0.0
        %v338 = vstv %s328
        %v339 = vmin.f32 %v338, %v320
        %v340 = vstv %s324
        %v341 = vmax.f32 %v340, %v316
        %v342 = vsub.f32 %v339, %v341
        %v343 = vmax.f32 %v342, 0.0
        %v344 = vmul.f32 %v337, %v343
        %v345 = vsub.f32 %v318, %v314
        %v346 = vsub.f32 %v320, %v316
        %v347 = vmul.f32 %v345, %v346
        %v348 = vstv %s331
        %v349 = vadd.f32 %v348, %v347
        %v350 = vsub.f32 %v349, %v344
        %v351 = vadd.f32 %v350, 1e-08
        %v352 = vrcp.pop %v351
        %v353 = vmul.f32 %v344, %v352
        %v354 = vlaneseq
        %v355 = vshrl.u32 %v354, 7
        %v356 = vmul.u32 %v355, 128
        %v357 = vadd.s32 %v356, %v233
        %358 = vmax.xlane.f32.xlu0 %v353
        %v359 = vpop.xlane.xlu0 %358
        %v360 = vrot.slane %v359, 4
        %v361 = vmax.f32 %v359, %v360
        %v362 = vrot.slane %v361, 2
        %v363 = vmax.f32 %v361, %v362
        %v364 = vrot.slane %v363, 1
        %v365 = vmax.f32 %v363, %v364
        %s366 = vtos %v365
        %v367 = vstv %s366
        %vm368 = vcmp.eq.f32.partialorder %v353, %v367
        %v369 = vsel %vm368, %v357, 1024
        %v370 = vand.u32 %v369, 65535
        %v371 = vshra.s32 %v369, 16
        %v372 = vcvt.s32.f32 %v370
        %v373 = vcvt.s32.f32 %v371
        %374 = vmin.xlane.f32.xlu0 %v373
        %v375 = vpop.xlane.xlu0 %374
        %vm376 = vcmp.eq.f32.partialorder %v373, %v375
        %v377 = vsel %vm376, %v372, inf
        %378 = vmin.xlane.f32.xlu0 %v377
        %v379 = vpop.xlane.xlu0 %378
        %v380 = vcvt.f32.s32 %v379
        %v381 = vcvt.f32.s32 %v375
        %v382 = vshll.u32 %v381, 16
        %v383 = vadd.s32 %v382, %v380
        %v384 = vrot.slane %v383, 4
        %vm385 = vcmp.lt.s32.totalorder %v383, %v384
        %v386 = vsel %vm385, %v383, %v384
        %v387 = vrot.slane %v386, 2
        %vm388 = vcmp.lt.s32.totalorder %v386, %v387
        %v389 = vsel %vm388, %v386, %v387
        %v390 = vrot.slane %v389, 1
        %vm391 = vcmp.lt.s32.totalorder %v389, %v390
        %v392 = vsel %vm391, %v389, %v390
        %s393 = vtos %v392
        %v394 = vadd.f32 %v260, 0.0
        %395 = vst [vmem:[%s226] sm:$0x1] %v394
        %vm396 = vcmp.eq.s32.totalorder %v355, 0
        %v397 = vstv %s313
        %v398 = vstv %s393
        %v399 = vsel %vm396, %v397, %v398
        %400 = vst [vmem:[%s230] sm:$0x3] %v399
        %p401 = scmp.lt.s32.totalorder %s18, 1
        %s402 = scalar_select %p401, %s18, 1
        %s403 = scalar_lea.vmem %s3, %s402
        %p404 = scmp.lt.s32.totalorder %s18, 1
        %s405 = scalar_select %p404, %s18, 1
        %s406 = smul.addr %s405, 2
        %s407 = scalar_lea.vmem %s4, %s406
        // Predicated region
        $region41: #{_device_eval.1} parent=31 // pred_check
          %p408 = pneg %p104
        $region42: #{_device_eval.1} parent=31 // pred_check_branch
          %410 = sbr.rel (%p408) target = $region44
        $region43: #{_device_eval.1} parent=31 // pred_region
          _
        $region44: #{_device_eval.1} parent=31 // pred_fallthru
          _
        // Predicated region
        $region45: #{_device_eval.1} parent=31 // pred_check
          %p411 = pneg %p130
        $region46: #{_device_eval.1} parent=31 // pred_check_branch
          %413 = sbr.rel (%p411) target = $region48
        $region47: #{_device_eval.1} parent=31 // pred_region
          _
        $region48: #{_device_eval.1} parent=31 // pred_fallthru
          _
      $region32: #{_device_eval.1} parent=5 // pred_fallthru
        _
      %p414 = scmp.le.s32.totalorder 2, %s13
      // Predicated region
      $region49: #{_device_eval.1} parent=5 // pred_check
        %p415 = pneg %p414
      $region50: #{_device_eval.1} parent=5 // pred_check_branch
        %417 = sbr.rel (%p415) target = $region52
      $region51: #{_device_eval.1} parent=5 // pred_region
        %s418 = ssub.s32 %s13, 2
        // Predicated region
        $region53: #{_device_eval.1} parent=51 // pred_check
          %p419 = pneg %p110
        $region54: #{_device_eval.1} parent=51 // pred_check_branch
          %421 = sbr.rel (%p419) target = $region56
        $region55: #{_device_eval.1} parent=51 // pred_region
          %p422 = scmp.lt.s32.totalorder %s19, 1
          %s423 = scalar_select %p422, %s19, 1
          %s424 = scalar_lea.vmem %s3, %s423
        $region56: #{_device_eval.1} parent=51 // pred_fallthru
          _
        // Predicated region
        $region57: #{_device_eval.1} parent=51 // pred_check
          %p425 = pneg %p136
        $region58: #{_device_eval.1} parent=51 // pred_check_branch
          %427 = sbr.rel (%p425) target = $region60
        $region59: #{_device_eval.1} parent=51 // pred_region
          %p428 = scmp.lt.s32.totalorder %s19, 1
          %s429 = scalar_select %p428, %s19, 1
          %s430 = smul.addr %s429, 2
          %s431 = scalar_lea.vmem %s4, %s430
        $region60: #{_device_eval.1} parent=51 // pred_fallthru
          _
      $region52: #{_device_eval.1} parent=5 // pred_fallthru
        _
    $region6: #{_device_eval.1} parent=1 // loop_footer
      %s17 = sadd.s32 1, %s13
    $region7: #{_device_eval.1} parent=1 // loop_footer_branch
      %12 = sbr.rel target = $region3
    $region8: #{_device_eval.1} parent=1 // loop_exit
      _
    %432 = vsyncpa [#allocation3], 1
    %s433 = scalar_lea.sflag [#allocation3], 1
    %434 = vsyncpa %s433, 1
    %435 = vsyncpa [#allocation4], 1
    %s436 = scalar_lea.sflag [#allocation4], 1
    %437 = vsyncpa %s436, 1

</llo_original>
